<compile_context>
chip_gen: v7x
topology: tpu7x:2x2x1
jax: 0.10.0
libtpu: 0.0.40
codegen_flags: <defaults>
</compile_context>

<pallas_src>
import functools
import math

import jax
import jax.numpy as jnp
from jax.experimental import pallas as pl
from jax.experimental.pallas import tpu as pltpu

_LANES = 128
_MAX_BLOCK_ROWS = 1024   # 1024 x 128 x f32 = 512 KiB per buffer
_MIN_BLOCK_ROWS = 8      # sublane granularity


def _mix_seed(seed: int) -> int:
    """lowbias32 hash of the Python seed (done at trace time, plain ints)."""
    x = seed & 0xFFFFFFFF
    x ^= x >> 16
    x = (x * 0x7FEB352D) & 0xFFFFFFFF
    x ^= x >> 15
    x = (x * 0x846CA68B) & 0xFFFFFFFF
    x ^= x >> 16
    return x


def _hash_u32(x):
    """lowbias32 hash, elementwise on uint32 arrays (VPU bit ops only)."""
    x = x ^ (x >> jnp.uint32(16))
    x = x * jnp.uint32(0x7FEB352D)
    x = x ^ (x >> jnp.uint32(15))
    x = x * jnp.uint32(0x846CA68B)
    x = x ^ (x >> jnp.uint32(16))
    return x


def _gaussian_noise(shape, block_rows, seed_mixed):
    """Standard-normal noise via counter-based hashing + Box-Muller.

    Deterministic given (seed, element index); independent of tiling/grid
    sharding, so "parallel" dimension semantics cannot change results.
    """
    row = jax.lax.broadcasted_iota(jnp.int32, shape, 0)
    col = jax.lax.broadcasted_iota(jnp.int32, shape, 1)
    tile_off = pl.program_id(0) * block_rows
    gid = (row + tile_off) * shape[1] + col            # global element index
    k = (gid * 2).astype(jnp.uint32)                   # two draws per element
    base = jnp.uint32(seed_mixed)
    b1 = _hash_u32(k ^ base)
    b2 = _hash_u32((k + jnp.uint32(1)) ^ base)
    # top 24 random bits -> uniform in (0, 1)
    scale = 1.0 / 16777216.0
    u1 = ((b1 >> jnp.uint32(8)).astype(jnp.int32).astype(jnp.float32) + 0.5) * scale
    u2 = ((b2 >> jnp.uint32(8)).astype(jnp.int32).astype(jnp.float32) + 0.5) * scale
    r = jnp.sqrt(-2.0 * jnp.log(u1))                   # EUP ops (cheap, mem-bound kernel)
    theta = (2.0 * math.pi) * u2
    return r * jnp.cos(theta)


def _pd_complex_kernel(re_ref, im_ref, out_ref, *, responsivity, dark_current,
                       noise_std, seed_mixed, block_rows):
    re = re_ref[...]
    im = im_ref[...]
    pc = responsivity * (re * re + im * im) + dark_current
    if noise_std is not None:   # static (trace-time) branch: training only
        pc = pc + noise_std * _gaussian_noise(re.shape, block_rows, seed_mixed)
    out_ref[...] = pc


def _pd_real_kernel(x_ref, out_ref, *, responsivity, dark_current,
                    noise_std, seed_mixed, block_rows):
    x = x_ref[...]
    pc = responsivity * (x * x) + dark_current
    if noise_std is not None:
        pc = pc + noise_std * _gaussian_noise(x.shape, block_rows, seed_mixed)
    out_ref[...] = pc


def photodetector_forward(optical_signal,
                          responsivity: float = 1.0,
                          dark_current: float = 1e-9,
                          thermal_noise: float = 1e-12,
                          bandwidth: float = 1e10,
                          training: bool = False,
                          seed: int = 0,
                          xla_fallback_min_elems: int = 0):
    orig_shape = optical_signal.shape
    noise_std = float(math.sqrt(thermal_noise * bandwidth)) if training else None

    if jnp.iscomplexobj(optical_signal):
        # TODO(synk): de-interleave complex64 inside the kernel (bitcast to an
        # interleaved f32 slab) to avoid these two wrapper-side passes.
        re = jnp.real(optical_signal).astype(jnp.float32)
        im = jnp.imag(optical_signal).astype(jnp.float32)
    else:
        re = optical_signal.astype(jnp.float32)
        im = None   # real-input fast path: no zero imag plane is streamed

    n = int(re.size)

    # Tiny-tensor escape hatch (disabled by default so the Pallas path runs):
    # for sub-threshold sizes XLA fuses this elementwise op fine and avoids the
    # fixed pallas_call launch + reshape overhead.
    if n < xla_fallback_min_elems:
        power = re * re if im is None else re * re + im * im
        pc = responsivity * power + dark_current
        if training:
            pc = pc + noise_std * jax.random.normal(
                jax.random.PRNGKey(seed), pc.shape, jnp.float32)
        return pc.reshape(orig_shape)

    # Flatten -> lane-dense (rows, 128) slab, rows a multiple of 8. Only pad
    # when n is not already a multiple of 8*128 (common NCHW sizes need none).
    tile_elems = _MIN_BLOCK_ROWS * _LANES
    n_pad = pl.cdiv(n, tile_elems) * tile_elems
    pad = n_pad - n
    rows = n_pad // _LANES

    def slab(x):
        x = x.reshape(-1)
        if pad:
            x = jnp.pad(x, (0, pad))
        return x.reshape(rows, _LANES)

    block_rows = min(_MAX_BLOCK_ROWS, rows)
    grid = (pl.cdiv(rows, block_rows),)          # last block may overhang; OOB
    blk = pl.BlockSpec((block_rows, _LANES), lambda i: (i, 0))  # writes masked
    out_shape = jax.ShapeDtypeStruct((rows, _LANES), jnp.float32)

    common = dict(responsivity=float(responsivity),
                  dark_current=float(dark_current),
                  noise_std=noise_std,
                  seed_mixed=_mix_seed(int(seed)),
                  block_rows=block_rows)

    if im is None:
        kernel = functools.partial(_pd_real_kernel, **common)
        operands = (slab(re),)
        in_specs = [blk]
    else:
        kernel = functools.partial(_pd_complex_kernel, **common)
        operands = (slab(re), slab(im))
        in_specs = [blk, blk]

    out2 = pl.pallas_call(
        kernel,
        out_shape=out_shape,
        grid=grid,
        in_specs=in_specs,
        out_specs=blk,
        compiler_params=pltpu.CompilerParams(
            dimension_semantics=("parallel",)),
    )(*operands)

    return out2.reshape(-1)[:n].reshape(orig_shape)


if __name__ == "__main__":
    key = jax.random.PRNGKey(0)
    k_re, k_im = jax.random.split(key)
    B, C, H, W = 2, 4, 16, 16
    re = jax.random.normal(k_re, (B, C, H, W), dtype=jnp.float32)
    im = jax.random.normal(k_im, (B, C, H, W), dtype=jnp.float32)
    optical_signal = re + 1j * im  # complex64 optical field, NCHW shape

    responsivity, dark_current = 1.0, 1e-9
    ref = responsivity * jnp.abs(optical_signal) ** 2 + dark_current

    # Eval-mode (deterministic) forward, complex input.
    out_eval = photodetector_forward(
        optical_signal, responsivity=responsivity, dark_current=dark_current,
        training=False)
    out_eval = jax.block_until_ready(out_eval)
    assert out_eval.shape == (B, C, H, W)
    assert jnp.allclose(out_eval, ref, rtol=1e-5, atol=1e-6), "complex eval mismatch"

    # Eval-mode forward, real-input fast path (single-plane kernel).
    out_real = photodetector_forward(
        re, responsivity=responsivity, dark_current=dark_current, training=False)
    out_real = jax.block_until_ready(out_real)
    assert jnp.allclose(out_real, responsivity * re * re + dark_current,
                        rtol=1e-5, atol=1e-6), "real eval mismatch"

    # Training-mode forward (adds gaussian thermal noise inside the kernel).
    out_train = photodetector_forward(
        optical_signal, responsivity=responsivity, dark_current=dark_current,
        thermal_noise=1e-12, bandwidth=1e10, training=True, seed=0)
    out_train = jax.block_until_ready(out_train)
    assert out_train.shape == (B, C, H, W)
    assert bool(jnp.all(jnp.isfinite(out_train)))
    noise = out_train - ref          # expected ~N(0, 0.1^2)
    assert abs(float(jnp.mean(noise))) < 0.02, "noise mean off"
    assert 0.07 < float(jnp.std(noise)) < 0.13, "noise std off"

    print("KERNEL_OK")
</pallas_src>

<mosaic_0001>
module attributes {stable_mosaic.version = 11 : i64} {
  func.func @_pd_complex_kernel(%arg0: i32, %arg1: memref<16x128xf32, #tpu.memory_space<vmem>>, %arg2: memref<16x128xf32, #tpu.memory_space<vmem>>, %arg3: memref<16x128xf32, #tpu.memory_space<vmem>>) attributes {dimension_semantics = [#tpu.dimension_semantics<parallel>], iteration_bounds = array<i64: 1>, scalar_prefetch = 0 : i64, scratch_operands = 0 : i64, tpu.core_type = #tpu.core_type<tc>, window_params = [{transform_indices = @transform_0, window_bounds = array<i64: 16, 128>}, {transform_indices = @transform_1, window_bounds = array<i64: 16, 128>}, {transform_indices = @transform_2, window_bounds = array<i64: 16, 128>}]} {
    %c0 = arith.constant 0 : index
    %c0_0 = arith.constant 0 : index
    %0 = vector.load %arg1[%c0, %c0_0] : memref<16x128xf32, #tpu.memory_space<vmem>>, vector<16x128xf32>
    %c0_1 = arith.constant 0 : index
    %c0_2 = arith.constant 0 : index
    %1 = vector.load %arg2[%c0_1, %c0_2] : memref<16x128xf32, #tpu.memory_space<vmem>>, vector<16x128xf32>
    %2 = arith.mulf %0, %0 : vector<16x128xf32>
    %3 = arith.mulf %1, %1 : vector<16x128xf32>
    %4 = arith.addf %2, %3 : vector<16x128xf32>
    %cst = arith.constant 1.000000e+00 : f32
    %5 = vector.broadcast %cst : f32 to vector<16x128xf32>
    %6 = arith.mulf %5, %4 : vector<16x128xf32>
    %cst_3 = arith.constant 9.99999971E-10 : f32
    %7 = vector.broadcast %cst_3 : f32 to vector<16x128xf32>
    %8 = arith.addf %6, %7 : vector<16x128xf32>
    %c0_4 = arith.constant 0 : index
    %c0_5 = arith.constant 0 : index
    %9 = vector.load %arg3[%c0_4, %c0_5] : memref<16x128xf32, #tpu.memory_space<vmem>>, vector<16x128xf32>
    tpu.vector_store %arg3[%c0_4, %c0_5], %8 {strides = array<i32>} : memref<16x128xf32, #tpu.memory_space<vmem>>, vector<16x128xf32>,
    return
  }
  func.func @transform_0(%arg0: i32) -> (i32, i32) {
    %c0_i32 = arith.constant 0 : i32
    %c0_i32_0 = arith.constant 0 : i32
    return %arg0, %c0_i32 : i32, i32
  }
  func.func @transform_1(%arg0: i32) -> (i32, i32) {
    %c0_i32 = arith.constant 0 : i32
    %c0_i32_0 = arith.constant 0 : i32
    return %arg0, %c0_i32 : i32, i32
  }
  func.func @transform_2(%arg0: i32) -> (i32, i32) {
    %c0_i32 = arith.constant 0 : i32
    %c0_i32_0 = arith.constant 0 : i32
    return %arg0, %c0_i32 : i32, i32
  }
}

</mosaic_0001>

<llo_original>
// kernel: tpu_custom_call.1
$region0: #{tpu_custom_call.1}
  #allocation0 [shape = 'u32[]', space=smem, size = 0x4, offset = 0x4, fixed_abs, tag = 'smem constant byte address 0x4 - core index']
  #allocation1 [shape = 'u32[144,128]{1,0:T(1,128)}', space=vmem, size = 0x12000, scoped, tag = 'internal scratch']
  %s0 = inlined_call_operand.hbm [shape: f32[16,128], index: 0, kind: input, shape index: {}]
  %s1 = inlined_call_operand.hbm [shape: f32[16,128], index: 1, kind: input, shape index: {}]
  %s2 = inlined_call_operand.hbm [shape: f32[16,128], index: 2, kind: output, shape index: {}]
  %s3 = sld [smem:[#allocation0]]
  $region26: #{tpu_custom_call.1} parent=0
    _
  %s5 = ssub.s32 1, %s3
  %s6 = scalar_select 0, %s5, %s3
  $region1: #{tpu_custom_call.1} parent=0
    #allocation2 [shape = 'u8[8192]{0}', space=vmem, size = 0x2000, scoped, tag = 'input window, operand 0, single buffered']
    #allocation3 [shape = 's32[1]{0}', space=sflag, size = 0x4, scoped, tag = 'scoped memory for tpu_custom_call.1']
    #allocation4 [shape = 's32[1]{0}', space=sflag, size = 0x4, scoped, tag = 'scoped memory for tpu_custom_call.1']
    #allocation5 [shape = 'u8[8192]{0}', space=vmem, size = 0x2000, scoped, tag = 'input window, operand 1, single buffered']
    #allocation6 [shape = 's32[1]{0}', space=sflag, size = 0x4, scoped, tag = 'scoped memory for tpu_custom_call.1']
    #allocation7 [shape = 'u8[8192]{0}', space=vmem, size = 0x2000, scoped, tag = 'output window, operand 0, single buffered']
    %7 = vsyncpa [#allocation3], 0
    %8 = vsyncpa [#allocation6], 0
    %9 = vsyncpa [#allocation4], 0
    // Predicated region
    $region2: #{tpu_custom_call.1} parent=1 // pred_check
      _
    $region3: #{tpu_custom_call.1} parent=1 // pred_check_branch
      %11 = sbr.rel (0) target = $region5
    $region4: #{tpu_custom_call.1} parent=1 // pred_region
      %s13 = ssub.s32 256, 256
      %14 = vsyncadd [#allocation3], %s13
      %s15 = sshll.u32 [#allocation2], 4
      %s16 = int_to_ptr.vmem [resolvable:$true] %s15
      %21 = dma.hbm_to_vmem [thread:$0]  %s0, 256, %s16, [#allocation3], 128, 128, 8
    $region5: #{tpu_custom_call.1} parent=1 // pred_fallthru
      _
    // Predicated region
    $region6: #{tpu_custom_call.1} parent=1 // pred_check
      _
    $region7: #{tpu_custom_call.1} parent=1 // pred_check_branch
      %23 = sbr.rel (0) target = $region9
    $region8: #{tpu_custom_call.1} parent=1 // pred_region
      %s25 = ssub.s32 256, 256
      %26 = vsyncadd [#allocation6], %s25
      %s27 = sshll.u32 [#allocation5], 4
      %s28 = int_to_ptr.vmem [resolvable:$true] %s27
      %33 = dma.hbm_to_vmem [thread:$0]  %s1, 256, %s28, [#allocation6], 128, 128, 8
    $region9: #{tpu_custom_call.1} parent=1 // pred_fallthru
      _
    // Predicated region
    $region10: #{tpu_custom_call.1} parent=1 // pred_check
      _
    $region11: #{tpu_custom_call.1} parent=1 // pred_check_branch
      %35 = sbr.rel (0) target = $region13
    $region12: #{tpu_custom_call.1} parent=1 // pred_region
      %36 = dma.done [#allocation3], 256
    $region13: #{tpu_custom_call.1} parent=1 // pred_fallthru
      _
    // Predicated region
    $region14: #{tpu_custom_call.1} parent=1 // pred_check
      _
    $region15: #{tpu_custom_call.1} parent=1 // pred_check_branch
      %38 = sbr.rel (0) target = $region17
    $region16: #{tpu_custom_call.1} parent=1 // pred_region
      %39 = dma.done [#allocation6], 256
    $region17: #{tpu_custom_call.1} parent=1 // pred_fallthru
      _
    %v40 = vld [vmem:[#allocation2] sm:$0xff]
    %v41 = vld [vmem:[#allocation2 + $0x8] sm:$0xff]
    %v42 = vld [vmem:[#allocation5] sm:$0xff]
    %v43 = vld [vmem:[#allocation5 + $0x8] sm:$0xff]
    %v44 = vmul.f32 %v40, %v40
    %v45 = vmul.f32 %v41, %v41
    %v46 = vmul.f32 %v42, %v42
    %v47 = vmul.f32 %v43, %v43
    %v48 = vadd.f32 %v44, %v46
    %v49 = vadd.f32 %v45, %v47
    %v50 = vadd.f32 %v48, 1e-09
    %v51 = vadd.f32 %v49, 1e-09
    %52 = vst [vmem:[#allocation7] sm:$0xff] %v50
    %53 = vst [vmem:[#allocation7 + $0x8] sm:$0xff] %v51
    // Predicated region
    $region18: #{tpu_custom_call.1} parent=1 // pred_check
      _
    $region19: #{tpu_custom_call.1} parent=1 // pred_check_branch
      %55 = sbr.rel (0) target = $region21
    $region20: #{tpu_custom_call.1} parent=1 // pred_region
      %s57 = ssub.s32 256, 256
      %58 = vsyncadd [#allocation4], %s57
      %s59 = sshll.u32 [#allocation7], 4
      %s60 = int_to_ptr.vmem [resolvable:$true] %s59
      %65 = dma.vmem_to_hbm [thread:$0]  %s60, 256, %s2, [#allocation4], 128, 128, 8
    $region21: #{tpu_custom_call.1} parent=1 // pred_fallthru
      _
    // Predicated region
    $region22: #{tpu_custom_call.1} parent=1 // pred_check
      _
    $region23: #{tpu_custom_call.1} parent=1 // pred_check_branch
      %67 = sbr.rel (0) target = $region25
    $region24: #{tpu_custom_call.1} parent=1 // pred_region
      %68 = dma.done [#allocation4], 256
    $region25: #{tpu_custom_call.1} parent=1 // pred_fallthru
      _
    %69 = vsyncpa [#allocation3], 1
    %70 = vsyncpa [#allocation6], 1
    %71 = vsyncpa [#allocation4], 1

</llo_original>
